<compile_context>
chip_gen: v7x
topology: tpu7x:2x2x1
jax: 0.10.0
libtpu: 0.0.40
codegen_flags: <defaults>
</compile_context>

<pallas_src>
import functools
import math

import jax
import jax.numpy as jnp
from jax.experimental import pallas as pl
from jax.experimental.pallas import tpu as pltpu


def _round_up(x, m):
    return (x + m - 1) // m * m


def _vmem_capacity_bytes():
    """Per-TensorCore VMEM capacity; conservative fallback if the query fails."""
    try:
        return int(pltpu.get_tpu_info().vmem_capacity_bytes)
    except Exception:
        return 64 * 2 ** 20   # v7x per-TC VMEM (smallest current chip)


def _gelu_tanh(x):
    # PyTorch nn.GELU(approximate='tanh'); jnp.tanh lowers to the EUP slot so
    # the activation is essentially free next to the MXU work.
    # TODO(synk): PyTorch's default GELU is the exact erf form; the tanh form
    # differs by <~1e-3 abs.  Swap to jax.lax.erf if exact parity is required.
    c = math.sqrt(2.0 / math.pi)
    return 0.5 * x * (1.0 + jnp.tanh(c * (x + 0.044715 * (x * x * x))))


def _mlp_decoder_kernel(z_ref, w1_ref, b1_ref, g_ref, beta_ref, w2_ref, b2_ref,
                        o_ref, *, is_norm, eps, hidden_real, matmul_dtype):
    # In-register cast of z to the MXU dtype (z travels HBM->VMEM as f32).
    z = z_ref[...].astype(matmul_dtype)

    # Linear 1 (MXU): bf16 x bf16 -> f32 accumulate.
    h = jnp.dot(z, w1_ref[...], preferred_element_type=jnp.float32) + b1_ref[...]

    # LayerNorm over the *real* hidden width.  Padded hidden columns of h are
    # exactly zero (padded w1 columns and b1 entries are zero), so sum(h) and
    # sum(h*h) over the padded width already equal the sums over the real
    # width -- no mask needed.  E[x^2]-mean^2 in f32 is stable enough here.
    inv_h = 1.0 / float(hidden_real)
    mean = jnp.sum(h, axis=-1, keepdims=True) * inv_h
    ex2 = jnp.sum(h * h, axis=-1, keepdims=True) * inv_h
    var = jnp.maximum(ex2 - mean * mean, 0.0)
    h_norm = (h - mean) * jax.lax.rsqrt(var + eps) * g_ref[...] + beta_ref[...]
    # Padded columns: gamma == beta == 0  ->  h_norm == 0  ->  gelu(0) == 0,
    # and the padded rows of w2 are zero, so the second matmul is unaffected.

    act = _gelu_tanh(h_norm)

    # Linear 2 (MXU).
    out = jnp.dot(act.astype(matmul_dtype), w2_ref[...],
                  preferred_element_type=jnp.float32) + b2_ref[...]

    if is_norm:
        out = jax.nn.sigmoid(out)   # exp -> EUP slot

    o_ref[...] = out.astype(o_ref.dtype)   # lane-dense (128-multiple) store


def prepare_params(params, *, matmul_dtype=jnp.bfloat16):
    """One-time: zero-pad every feature dim to a multiple of 128 and cast the
    weight matrices to the MXU dtype.  Call once and reuse across
    mlp_decoder() calls so per-call HBM traffic is just z in and out."""
    Z, H = params["w1"].shape
    O = params["w2"].shape[1]
    Zp, Hp, Op = (_round_up(d, 128) for d in (Z, H, O))
    f32 = jnp.float32

    def pad2(a, r, c):
        return jnp.pad(a, ((0, r - a.shape[0]), (0, c - a.shape[1])))

    return {
        "w1": pad2(params["w1"].astype(f32), Zp, Hp).astype(matmul_dtype),
        "w2": pad2(params["w2"].astype(f32), Hp, Op).astype(matmul_dtype),
        "b1": pad2(params["b1"].reshape(1, H).astype(f32), 1, Hp),
        "gamma": pad2(params["gamma"].reshape(1, H).astype(f32), 1, Hp),
        "beta": pad2(params["beta"].reshape(1, H).astype(f32), 1, Hp),
        "b2": pad2(params["b2"].reshape(1, O).astype(f32), 1, Op),
        "dims": (Z, H, O),
        "matmul_dtype": matmul_dtype,
    }


def mlp_decoder(z, prepared, *, is_norm=True, eps=1e-5, batch_tile=256,
                out_dtype=jnp.float32):
    """z: (B, z_dim) float32.  prepared: output of prepare_params()."""
    B, Z_in = z.shape
    Z, H, O = prepared["dims"]
    assert Z_in == Z, f"z has feature dim {Z_in}, expected {Z}"
    matmul_dtype = prepared["matmul_dtype"]

    Zp, Hp = prepared["w1"].shape
    Op = prepared["w2"].shape[1]
    w_bytes = jnp.dtype(matmul_dtype).itemsize
    o_bytes = jnp.dtype(out_dtype).itemsize

    # ---- Batch tile selection (chip-aware VMEM budget). --------------------
    # Only the lane (last) dim of a block must be a 128-multiple; the batch
    # (sublane) dim only needs to be a multiple of 8, so tiny batches stay tiny.
    bt = max(8, min(batch_tile, _round_up(B, 8)))

    vmem_budget = int(0.75 * _vmem_capacity_bytes())   # leave compiler headroom

    def vmem_need(btile):
        weights = 2 * (Zp * Hp + Hp * Op) * w_bytes      # default double-buffer
        vectors = 2 * (3 * Hp + Op) * 4                  # b1 / gamma / beta / b2
        z_io = 2 * btile * Zp * 4                        # f32 z tiles (dbl-buf)
        out_io = 2 * btile * Op * o_bytes                # out tiles (dbl-buf)
        temps = 6 * btile * Hp * 4                       # live f32 intermediates
        return weights + vectors + z_io + out_io + temps

    while bt > 8 and vmem_need(bt) > vmem_budget:
        bt = max(8, _round_up(bt // 2, 8))
    # TODO(synk): for hidden widths where the resident Zp*Hp + Hp*Op weights
    # alone exceed the VMEM budget, add an Hp-tiled streaming path
    # (two-pass LayerNorm stats + accumulated second matmul).

    Bp = _round_up(B, bt)
    # Prefer >= 2 grid steps so the "parallel" batch axis can shard across the
    # two v7x TensorCores (harmless elsewhere: ~0.35us extra per step).
    if Bp // bt < 2 and bt % 16 == 0 and bt // 2 >= 8:
        bt //= 2
        Bp = _round_up(B, bt)
    grid = (Bp // bt,)

    # ---- Per-call input prep: pad z only (no dtype cast here). -------------
    z_f32 = z.astype(jnp.float32)
    if (B, Z) != (Bp, Zp):
        z_p = jnp.pad(z_f32, ((0, Bp - B), (0, Zp - Z)))
    else:
        z_p = z_f32

    kernel = functools.partial(_mlp_decoder_kernel, is_norm=is_norm, eps=eps,
                               hidden_real=H, matmul_dtype=matmul_dtype)
    const = lambda i: (0, 0)

    # Scheduler hint for XLA around the custom call.
    flops = 2 * Bp * (Zp * Hp + Hp * Op)
    transcendentals = Bp * Hp + (Bp * Op if is_norm else 0)
    bytes_accessed = (Bp * Zp * 4 + (Zp * Hp + Hp * Op) * w_bytes
                      + (3 * Hp + Op) * 4 + Bp * Op * o_bytes)
    cost = pl.CostEstimate(flops=flops, transcendentals=transcendentals,
                           bytes_accessed=bytes_accessed)

    vmem_limit = int(min(vmem_budget,
                         max(16 * 2 ** 20, int(1.5 * vmem_need(bt)))))

    out_p = pl.pallas_call(
        kernel,
        out_shape=jax.ShapeDtypeStruct((Bp, Op), out_dtype),
        grid_spec=pltpu.PrefetchScalarGridSpec(
            num_scalar_prefetch=0,
            grid=grid,
            in_specs=[
                pl.BlockSpec((bt, Zp), lambda i: (i, 0)),  # z tile (f32)
                pl.BlockSpec((Zp, Hp), const),             # w1 (resident, bf16)
                pl.BlockSpec((1, Hp), const),              # b1
                pl.BlockSpec((1, Hp), const),              # gamma
                pl.BlockSpec((1, Hp), const),              # beta
                pl.BlockSpec((Hp, Op), const),             # w2 (resident, bf16)
                pl.BlockSpec((1, Op), const),              # b2
            ],
            out_specs=pl.BlockSpec((bt, Op), lambda i: (i, 0)),
        ),
        compiler_params=pltpu.CompilerParams(
            dimension_semantics=("parallel",),
            vmem_limit_bytes=vmem_limit),
        cost_estimate=cost,
    )(z_p, prepared["w1"], prepared["b1"], prepared["gamma"],
      prepared["beta"], prepared["w2"], prepared["b2"])

    return out_p[:B, :O]


def mlp_decoder_ref(z, params, *, is_norm=True, eps=1e-5):
    """Pure-JAX f32 reference (same tanh-GELU form) for a sanity check."""
    h = z @ params["w1"] + params["b1"]
    mean = jnp.mean(h, axis=-1, keepdims=True)
    var = jnp.mean((h - mean) ** 2, axis=-1, keepdims=True)
    hn = (h - mean) * jax.lax.rsqrt(var + eps) * params["gamma"] + params["beta"]
    out = _gelu_tanh(hn) @ params["w2"] + params["b2"]
    return jax.nn.sigmoid(out) if is_norm else out


def init_params(key, z_dim, hidden_dim, out_dim):
    k1, k2, k3, k4 = jax.random.split(key, 4)
    # Mimics PyTorch's uniform(-1/sqrt(fan_in), 1/sqrt(fan_in)) Linear init.
    lim1 = 1.0 / math.sqrt(z_dim)
    lim2 = 1.0 / math.sqrt(hidden_dim)
    return {
        "w1": jax.random.uniform(k1, (z_dim, hidden_dim), jnp.float32, -lim1, lim1),
        "b1": jax.random.uniform(k2, (hidden_dim,), jnp.float32, -lim1, lim1),
        "gamma": jnp.ones((hidden_dim,), jnp.float32),   # nn.LayerNorm default
        "beta": jnp.zeros((hidden_dim,), jnp.float32),
        "w2": jax.random.uniform(k3, (hidden_dim, out_dim), jnp.float32, -lim2, lim2),
        "b2": jax.random.uniform(k4, (out_dim,), jnp.float32, -lim2, lim2),
    }


if __name__ == "__main__":
    z_dim, hidden_dim, out_dim = 16, 32, 16
    batch = 8
    is_norm = True

    key = jax.random.PRNGKey(0)
    kp, kz = jax.random.split(key)
    params = init_params(kp, z_dim, hidden_dim, out_dim)
    z = jax.random.normal(kz, (batch, z_dim), jnp.float32)

    prepared = prepare_params(params)               # one-time weight prep
    out = mlp_decoder(z, prepared, is_norm=is_norm)
    jax.block_until_ready(out)
    assert out.shape == (batch, out_dim)

    ref = mlp_decoder_ref(z, params, is_norm=is_norm)
    err = float(jnp.max(jnp.abs(out - ref)))
    # Tolerance covers the bf16 MXU inputs (z/w1/w2/activations quantized to
    # bf16 with f32 accumulation); error at these magnitudes is ~1e-2.
    assert err < 5e-2, f"max abs err vs reference: {err}"

    print("KERNEL_OK")
</pallas_src>

<mosaic_0001>
module attributes {stable_mosaic.version = 11 : i64} {
  func.func @_mlp_decoder_kernel(%arg0: i32, %arg1: memref<8x128xf32, #tpu.memory_space<vmem>>, %arg2: memref<128x128xbf16, #tpu.memory_space<vmem>>, %arg3: memref<1x128xf32, #tpu.memory_space<vmem>>, %arg4: memref<1x128xf32, #tpu.memory_space<vmem>>, %arg5: memref<1x128xf32, #tpu.memory_space<vmem>>, %arg6: memref<128x128xbf16, #tpu.memory_space<vmem>>, %arg7: memref<1x128xf32, #tpu.memory_space<vmem>>, %arg8: memref<8x128xf32, #tpu.memory_space<vmem>>) attributes {dimension_semantics = [#tpu.dimension_semantics<parallel>], iteration_bounds = array<i64: 1>, scalar_prefetch = 0 : i64, scratch_operands = 0 : i64, tpu.core_type = #tpu.core_type<tc>, window_params = [{transform_indices = @transform_0, window_bounds = array<i64: 8, 128>}, {pipeline_mode = #tpu.pipeline_mode<synchronous>, transform_indices = @transform_1, window_bounds = array<i64: 128, 128>}, {pipeline_mode = #tpu.pipeline_mode<synchronous>, transform_indices = @transform_2, window_bounds = array<i64: 1, 128>}, {pipeline_mode = #tpu.pipeline_mode<synchronous>, transform_indices = @transform_3, window_bounds = array<i64: 1, 128>}, {pipeline_mode = #tpu.pipeline_mode<synchronous>, transform_indices = @transform_4, window_bounds = array<i64: 1, 128>}, {pipeline_mode = #tpu.pipeline_mode<synchronous>, transform_indices = @transform_5, window_bounds = array<i64: 128, 128>}, {pipeline_mode = #tpu.pipeline_mode<synchronous>, transform_indices = @transform_6, window_bounds = array<i64: 1, 128>}, {transform_indices = @transform_7, window_bounds = array<i64: 8, 128>}]} {
    %c0 = arith.constant 0 : index
    %c0_0 = arith.constant 0 : index
    %0 = vector.load %arg1[%c0, %c0_0] : memref<8x128xf32, #tpu.memory_space<vmem>>, vector<8x128xf32>
    %1 = arith.truncf %0 : vector<8x128xf32> to vector<8x128xbf16>
    %c0_1 = arith.constant 0 : index
    %c0_2 = arith.constant 0 : index
    %2 = vector.load %arg2[%c0_1, %c0_2] : memref<128x128xbf16, #tpu.memory_space<vmem>>, vector<128x128xbf16>
    %cst = arith.constant dense<0.000000e+00> : vector<8x128xf32>
    %3 = tpu.matmul %1, %2, %cst {dimension_numbers = #tpu.dot_dimension_numbers<[1], [0], [0], [1], [0, 0, 1, 1], [], []>} : vector<8x128xbf16>, vector<128x128xbf16>, vector<8x128xf32> -> vector<8x128xf32>
    %c0_3 = arith.constant 0 : index
    %c0_4 = arith.constant 0 : index
    %4 = vector.load %arg3[%c0_3, %c0_4] : memref<1x128xf32, #tpu.memory_space<vmem>>, vector<1x128xf32>
    %5 = vector.broadcast %4 : vector<1x128xf32> to vector<8x128xf32>
    %6 = arith.addf %3, %5 : vector<8x128xf32>
    %cst_5 = arith.constant dense<0.000000e+00> : vector<8xf32>
    %7 = vector.multi_reduction <add>, %6, %cst_5 [1] : vector<8x128xf32> to vector<8xf32>
    %8 = vector.shape_cast %7 : vector<8xf32> to vector<8x1xf32>
    %cst_6 = arith.constant 3.125000e-02 : f32
    %9 = vector.broadcast %cst_6 : f32 to vector<8x1xf32>
    %10 = arith.mulf %8, %9 : vector<8x1xf32>
    %11 = arith.mulf %6, %6 : vector<8x128xf32>
    %cst_7 = arith.constant dense<0.000000e+00> : vector<8xf32>
    %12 = vector.multi_reduction <add>, %11, %cst_7 [1] : vector<8x128xf32> to vector<8xf32>
    %13 = vector.shape_cast %12 : vector<8xf32> to vector<8x1xf32>
    %cst_8 = arith.constant 3.125000e-02 : f32
    %14 = vector.broadcast %cst_8 : f32 to vector<8x1xf32>
    %15 = arith.mulf %13, %14 : vector<8x1xf32>
    %16 = arith.mulf %10, %10 : vector<8x1xf32>
    %17 = arith.subf %15, %16 : vector<8x1xf32>
    %cst_9 = arith.constant 0.000000e+00 : f32
    %18 = vector.broadcast %cst_9 : f32 to vector<8x1xf32>
    %19 = arith.maximumf %17, %18 : vector<8x1xf32>
    %20 = vector.broadcast %10 : vector<8x1xf32> to vector<8x128xf32>
    %21 = arith.subf %6, %20 : vector<8x128xf32>
    %cst_10 = arith.constant 9.99999974E-6 : f32
    %22 = vector.broadcast %cst_10 : f32 to vector<8x1xf32>
    %23 = arith.addf %19, %22 : vector<8x1xf32>
    %24 = math.rsqrt %23 : vector<8x1xf32>
    %25 = vector.broadcast %24 : vector<8x1xf32> to vector<8x128xf32>
    %26 = arith.mulf %21, %25 : vector<8x128xf32>
    %c0_11 = arith.constant 0 : index
    %c0_12 = arith.constant 0 : index
    %27 = vector.load %arg4[%c0_11, %c0_12] : memref<1x128xf32, #tpu.memory_space<vmem>>, vector<1x128xf32>
    %28 = vector.broadcast %27 : vector<1x128xf32> to vector<8x128xf32>
    %29 = arith.mulf %26, %28 : vector<8x128xf32>
    %c0_13 = arith.constant 0 : index
    %c0_14 = arith.constant 0 : index
    %30 = vector.load %arg5[%c0_13, %c0_14] : memref<1x128xf32, #tpu.memory_space<vmem>>, vector<1x128xf32>
    %31 = vector.broadcast %30 : vector<1x128xf32> to vector<8x128xf32>
    %32 = arith.addf %29, %31 : vector<8x128xf32>
    %cst_15 = arith.constant 5.000000e-01 : f32
    %33 = vector.broadcast %cst_15 : f32 to vector<8x128xf32>
    %34 = arith.mulf %33, %32 : vector<8x128xf32>
    %35 = arith.mulf %32, %32 : vector<8x128xf32>
    %36 = arith.mulf %35, %32 : vector<8x128xf32>
    %cst_16 = arith.constant 4.471500e-02 : f32
    %37 = vector.broadcast %cst_16 : f32 to vector<8x128xf32>
    %38 = arith.mulf %37, %36 : vector<8x128xf32>
    %39 = arith.addf %32, %38 : vector<8x128xf32>
    %cst_17 = arith.constant 0.797884583 : f32
    %40 = vector.broadcast %cst_17 : f32 to vector<8x128xf32>
    %41 = arith.mulf %40, %39 : vector<8x128xf32>
    %42 = math.tanh %41 : vector<8x128xf32>
    %cst_18 = arith.constant 1.000000e+00 : f32
    %43 = vector.broadcast %cst_18 : f32 to vector<8x128xf32>
    %44 = arith.addf %43, %42 : vector<8x128xf32>
    %45 = arith.mulf %34, %44 : vector<8x128xf32>
    %46 = arith.truncf %45 : vector<8x128xf32> to vector<8x128xbf16>
    %c0_19 = arith.constant 0 : index
    %c0_20 = arith.constant 0 : index
    %47 = vector.load %arg6[%c0_19, %c0_20] : memref<128x128xbf16, #tpu.memory_space<vmem>>, vector<128x128xbf16>
    %cst_21 = arith.constant dense<0.000000e+00> : vector<8x128xf32>
    %48 = tpu.matmul %46, %47, %cst_21 {dimension_numbers = #tpu.dot_dimension_numbers<[1], [0], [0], [1], [0, 0, 1, 1], [], []>} : vector<8x128xbf16>, vector<128x128xbf16>, vector<8x128xf32> -> vector<8x128xf32>
    %c0_22 = arith.constant 0 : index
    %c0_23 = arith.constant 0 : index
    %49 = vector.load %arg7[%c0_22, %c0_23] : memref<1x128xf32, #tpu.memory_space<vmem>>, vector<1x128xf32>
    %50 = vector.broadcast %49 : vector<1x128xf32> to vector<8x128xf32>
    %51 = arith.addf %48, %50 : vector<8x128xf32>
    %52 = arith.negf %51 : vector<8x128xf32>
    %53 = math.exp %52 : vector<8x128xf32>
    %cst_24 = arith.constant 1.000000e+00 : f32
    %54 = vector.broadcast %cst_24 : f32 to vector<8x128xf32>
    %55 = arith.addf %54, %53 : vector<8x128xf32>
    %56 = arith.divf %54, %55 : vector<8x128xf32>
    %c0_25 = arith.constant 0 : index
    %c0_26 = arith.constant 0 : index
    %57 = vector.load %arg8[%c0_25, %c0_26] : memref<8x128xf32, #tpu.memory_space<vmem>>, vector<8x128xf32>
    tpu.vector_store %arg8[%c0_25, %c0_26], %56 {strides = array<i32>} : memref<8x128xf32, #tpu.memory_space<vmem>>, vector<8x128xf32>,
    return
  }
  func.func @transform_0(%arg0: i32) -> (i32, i32) {
    %c0_i32 = arith.constant 0 : i32
    %c0_i32_0 = arith.constant 0 : i32
    return %arg0, %c0_i32 : i32, i32
  }
  func.func @transform_1(%arg0: i32) -> (i32, i32) {
    %c0_i32 = arith.constant 0 : i32
    %c0_i32_0 = arith.constant 0 : i32
    %c0_i32_1 = arith.constant 0 : i32
    return %c0_i32, %c0_i32_0 : i32, i32
  }
  func.func @transform_2(%arg0: i32) -> (i32, i32) {
    %c0_i32 = arith.constant 0 : i32
    %c0_i32_0 = arith.constant 0 : i32
    %c0_i32_1 = arith.constant 0 : i32
    return %c0_i32, %c0_i32_0 : i32, i32
  }
  func.func @transform_3(%arg0: i32) -> (i32, i32) {
    %c0_i32 = arith.constant 0 : i32
    %c0_i32_0 = arith.constant 0 : i32
    %c0_i32_1 = arith.constant 0 : i32
    return %c0_i32, %c0_i32_0 : i32, i32
  }
  func.func @transform_4(%arg0: i32) -> (i32, i32) {
    %c0_i32 = arith.constant 0 : i32
    %c0_i32_0 = arith.constant 0 : i32
    %c0_i32_1 = arith.constant 0 : i32
    return %c0_i32, %c0_i32_0 : i32, i32
  }
  func.func @transform_5(%arg0: i32) -> (i32, i32) {
    %c0_i32 = arith.constant 0 : i32
    %c0_i32_0 = arith.constant 0 : i32
    %c0_i32_1 = arith.constant 0 : i32
    return %c0_i32, %c0_i32_0 : i32, i32
  }
  func.func @transform_6(%arg0: i32) -> (i32, i32) {
    %c0_i32 = arith.constant 0 : i32
    %c0_i32_0 = arith.constant 0 : i32
    %c0_i32_1 = arith.constant 0 : i32
    return %c0_i32, %c0_i32_0 : i32, i32
  }
  func.func @transform_7(%arg0: i32) -> (i32, i32) {
    %c0_i32 = arith.constant 0 : i32
    %c0_i32_0 = arith.constant 0 : i32
    return %arg0, %c0_i32 : i32, i32
  }
}

</mosaic_0001>

<llo_original>
// kernel: tpu_custom_call.1
$region0: #{tpu_custom_call.1}
  #allocation0 [shape = 'u32[]', space=smem, size = 0x4, offset = 0x4, fixed_abs, tag = 'smem constant byte address 0x4 - core index']
  #allocation1 [shape = 'u32[144,128]{1,0:T(1,128)}', space=vmem, size = 0x12000, scoped, tag = 'internal scratch']
  %s0 = inlined_call_operand.hbm [shape: f32[8,128], index: 0, kind: input, shape index: {}]
  %s1 = inlined_call_operand.hbm [shape: bf16[128,128], index: 1, kind: input, shape index: {}]
  %s2 = inlined_call_operand.vmem [shape: f32[1,128], index: 2, kind: input, shape index: {}]
  %s3 = inlined_call_operand.vmem [shape: f32[1,128], index: 3, kind: input, shape index: {}]
  %s4 = inlined_call_operand.vmem [shape: f32[1,128], index: 4, kind: input, shape index: {}]
  %s5 = inlined_call_operand.hbm [shape: bf16[128,128], index: 5, kind: input, shape index: {}]
  %s6 = inlined_call_operand.vmem [shape: f32[1,128], index: 6, kind: input, shape index: {}]
  %s7 = inlined_call_operand.hbm [shape: f32[8,128], index: 7, kind: output, shape index: {}]
  %s8 = sld [smem:[#allocation0]]
  $region50: #{tpu_custom_call.1} parent=0
    _
  %s10 = ssub.s32 1, %s8
  %s11 = scalar_select 0, %s10, %s8
  $region1: #{tpu_custom_call.1} parent=0
    #allocation2 [shape = 'u8[4096]{0}', space=vmem, size = 0x1000, scoped, tag = 'input window, operand 0, single buffered']
    #allocation3 [shape = 's32[1]{0}', space=sflag, size = 0x4, scoped, tag = 'scoped memory for tpu_custom_call.1']
    #allocation4 [shape = 's32[1]{0}', space=sflag, size = 0x4, scoped, tag = 'scoped memory for tpu_custom_call.1']
    #allocation5 [shape = 'u8[32768]{0}', space=vmem, size = 0x8000, scoped, tag = 'input window, operand 1, single buffered']
    #allocation6 [shape = 's32[1]{0}', space=sflag, size = 0x4, scoped, tag = 'scoped memory for tpu_custom_call.1']
    #allocation7 [shape = 'u8[32768]{0}', space=vmem, size = 0x8000, scoped, tag = 'input window, operand 5, single buffered']
    #allocation8 [shape = 'u8[4096]{0}', space=vmem, size = 0x1000, scoped, tag = 'output window, operand 0, single buffered']
    %12 = vsyncpa [#allocation3], 0
    %13 = vsyncpa [#allocation6], 0
    %14 = vsyncpa [#allocation4], 0
    // Predicated region
    $region2: #{tpu_custom_call.1} parent=1 // pred_check
      _
    $region3: #{tpu_custom_call.1} parent=1 // pred_check_branch
      %16 = sbr.rel (0) target = $region5
    $region4: #{tpu_custom_call.1} parent=1 // pred_region
      %s18 = ssub.s32 128, 128
      %19 = vsyncadd [#allocation3], %s18
      %s21 = sshll.u32 [#allocation2], 4
      %s22 = int_to_ptr.vmem [resolvable:$true] %s21
      %24 = dma.hbm_to_vmem [thread:$0]  %s0, 128, %s22, [#allocation3]
    $region5: #{tpu_custom_call.1} parent=1 // pred_fallthru
      _
    // Predicated region
    $region6: #{tpu_custom_call.1} parent=1 // pred_check
      _
    $region7: #{tpu_custom_call.1} parent=1 // pred_check_branch
      %26 = sbr.rel (0) target = $region9
    $region8: #{tpu_custom_call.1} parent=1 // pred_region
      %s28 = ssub.s32 1024, 1024
      %29 = vsyncadd [#allocation6], %s28
      %s30 = sshll.u32 [#allocation5], 4
      %s31 = int_to_ptr.vmem [resolvable:$true] %s30
      %36 = dma.hbm_to_vmem [thread:$0]  %s1, 1024, %s31, [#allocation6], 64, 64, 4
    $region9: #{tpu_custom_call.1} parent=1 // pred_fallthru
      _
    // Predicated region
    $region10: #{tpu_custom_call.1} parent=1 // pred_check
      _
    $region11: #{tpu_custom_call.1} parent=1 // pred_check_branch
      %38 = sbr.rel (0) target = $region13
    $region12: #{tpu_custom_call.1} parent=1 // pred_region
      _
    $region13: #{tpu_custom_call.1} parent=1 // pred_fallthru
      _
    // Predicated region
    $region14: #{tpu_custom_call.1} parent=1 // pred_check
      _
    $region15: #{tpu_custom_call.1} parent=1 // pred_check_branch
      %40 = sbr.rel (0) target = $region17
    $region16: #{tpu_custom_call.1} parent=1 // pred_region
      _
    $region17: #{tpu_custom_call.1} parent=1 // pred_fallthru
      _
    // Predicated region
    $region18: #{tpu_custom_call.1} parent=1 // pred_check
      _
    $region19: #{tpu_custom_call.1} parent=1 // pred_check_branch
      %42 = sbr.rel (0) target = $region21
    $region20: #{tpu_custom_call.1} parent=1 // pred_region
      _
    $region21: #{tpu_custom_call.1} parent=1 // pred_fallthru
      _
    // Predicated region
    $region22: #{tpu_custom_call.1} parent=1 // pred_check
      _
    $region23: #{tpu_custom_call.1} parent=1 // pred_check_branch
      %44 = sbr.rel (0) target = $region25
    $region24: #{tpu_custom_call.1} parent=1 // pred_region
      %s46 = ssub.s32 1024, 1024
      %47 = vsyncadd [#allocation6], %s46
      %s48 = sshll.u32 [#allocation7], 4
      %s49 = int_to_ptr.vmem [resolvable:$true] %s48
      %54 = dma.hbm_to_vmem [thread:$0]  %s5, 1024, %s49, [#allocation6], 64, 64, 4
    $region25: #{tpu_custom_call.1} parent=1 // pred_fallthru
      _
    // Predicated region
    $region26: #{tpu_custom_call.1} parent=1 // pred_check
      _
    $region27: #{tpu_custom_call.1} parent=1 // pred_check_branch
      %56 = sbr.rel (0) target = $region29
    $region28: #{tpu_custom_call.1} parent=1 // pred_region
      _
    $region29: #{tpu_custom_call.1} parent=1 // pred_fallthru
      _
    // Predicated region
    $region30: #{tpu_custom_call.1} parent=1 // pred_check
      _
    $region31: #{tpu_custom_call.1} parent=1 // pred_check_branch
      %58 = sbr.rel (0) target = $region33
    $region32: #{tpu_custom_call.1} parent=1 // pred_region
      %59 = dma.done [#allocation3], 128
    $region33: #{tpu_custom_call.1} parent=1 // pred_fallthru
      _
    // Predicated region
    $region34: #{tpu_custom_call.1} parent=1 // pred_check
      _
    $region35: #{tpu_custom_call.1} parent=1 // pred_check_branch
      %61 = sbr.rel (0) target = $region37
    $region36: #{tpu_custom_call.1} parent=1 // pred_region
      %62 = dma.done [#allocation6], 1024
    $region37: #{tpu_custom_call.1} parent=1 // pred_fallthru
      _
    // Predicated region
    $region38: #{tpu_custom_call.1} parent=1 // pred_check
      _
    $region39: #{tpu_custom_call.1} parent=1 // pred_check_branch
      %64 = sbr.rel (0) target = $region41
    $region40: #{tpu_custom_call.1} parent=1 // pred_region
      %65 = dma.done [#allocation6], 1024
    $region41: #{tpu_custom_call.1} parent=1 // pred_fallthru
      _
    %v67 = vld [vmem:[#allocation2] sm:$0xff]
    %v68 = vpack.c.bf16 %v67, %v67
    %v69 = vld [vmem:[#allocation5] sm:$0xf]
    %v70 = vld [vmem:[#allocation5 + $0x4] sm:$0xf]
    %v71 = vld [vmem:[#allocation5 + $0x8] sm:$0xf]
    %v72 = vld [vmem:[#allocation5 + $0xc] sm:$0xf]
    %v73 = vld [vmem:[#allocation5 + $0x10] sm:$0xf]
    %v74 = vld [vmem:[#allocation5 + $0x14] sm:$0xf]
    %v75 = vld [vmem:[#allocation5 + $0x18] sm:$0xf]
    %v76 = vld [vmem:[#allocation5 + $0x1c] sm:$0xf]
    %v77 = vld [vmem:[#allocation5 + $0x20] sm:$0xf]
    %v78 = vld [vmem:[#allocation5 + $0x24] sm:$0xf]
    %v79 = vld [vmem:[#allocation5 + $0x28] sm:$0xf]
    %v80 = vld [vmem:[#allocation5 + $0x2c] sm:$0xf]
    %v81 = vld [vmem:[#allocation5 + $0x30] sm:$0xf]
    %v82 = vld [vmem:[#allocation5 + $0x34] sm:$0xf]
    %v83 = vld [vmem:[#allocation5 + $0x38] sm:$0xf]
    %v84 = vld [vmem:[#allocation5 + $0x3c] sm:$0xf]
    %v85 = vld [vmem:[%s2] sm:$0x1]
    %v87 = vlaneseq
    %v88 = vshrl.u32 %v87, 7
    %v89 = vsub.s32 0, %v88
    %v90 = vrot.slane %v85, %v89
    %v108 = vunpack.c.l.b16 %v69
    %v109 = vunpack.c.l.b16 %v70
    %v110 = vunpack.c.l.b16 %v71
    %v111 = vunpack.c.l.b16 %v72
    %v112 = vunpack.c.l.b16 %v73
    %v113 = vunpack.c.l.b16 %v74
    %v114 = vunpack.c.l.b16 %v75
    %v115 = vunpack.c.l.b16 %v76
    %v116 = vunpack.c.l.b16 %v77
    %v117 = vunpack.c.l.b16 %v78
    %v118 = vunpack.c.l.b16 %v79
    %v119 = vunpack.c.l.b16 %v80
    %v120 = vunpack.c.l.b16 %v81
    %v121 = vunpack.c.l.b16 %v82
    %v122 = vunpack.c.l.b16 %v83
    %v123 = vunpack.c.l.b16 %v84
    %v124 = vpack.c.b16 %v109, %v108
    %v125 = vpack.c.b16 %v111, %v110
    %v126 = vpack.c.b16 %v113, %v112
    %v127 = vpack.c.b16 %v115, %v114
    %v128 = vpack.c.b16 %v117, %v116
    %v129 = vpack.c.b16 %v119, %v118
    %v130 = vpack.c.b16 %v121, %v120
    %v131 = vpack.c.b16 %v123, %v122
    %140 = vmatprep.subr.bf16.mxu0 0
    %141 = vmatpush1.bf16.msra.mxu0 %v124
    %142 = vmatprep.subr.bf16.mxu0 0
    %143 = vmatpush1.bf16.msra.mxu0 %v125
    %144 = vmatprep.subr.bf16.mxu0 0
    %145 = vmatpush1.bf16.msra.mxu0 %v126
    %146 = vmatprep.subr.bf16.mxu0 0
    %147 = vmatpush1.bf16.msra.mxu0 %v127
    %148 = vmatprep.subr.bf16.mxu0 0
    %149 = vmatpush1.bf16.msra.mxu0 %v128
    %150 = vmatprep.subr.bf16.mxu0 0
    %151 = vmatpush1.bf16.msra.mxu0 %v129
    %152 = vmatprep.subr.bf16.mxu0 0
    %153 = vmatpush1.bf16.msra.mxu0 %v130
    %154 = vmatprep.subr.bf16.mxu0 0
    %155 = vmatpush1.bf16.msra.mxu0 %v131
    %156 = vmatprep.subr.bf16.mxu0 0
    %157 = vmatpush1.bf16.msra.mxu0 0
    %158 = vmatprep.subr.bf16.mxu0 0
    %159 = vmatpush1.bf16.msra.mxu0 0
    %160 = vmatprep.subr.bf16.mxu0 0
    %161 = vmatpush1.bf16.msra.mxu0 0
    %162 = vmatprep.subr.bf16.mxu0 0
    %163 = vmatpush1.bf16.msra.mxu0 0
    %164 = vmatprep.subr.bf16.mxu0 0
    %165 = vmatpush1.bf16.msra.mxu0 0
    %166 = vmatprep.subr.bf16.mxu0 0
    %167 = vmatpush1.bf16.msra.mxu0 0
    %168 = vmatprep.subr.bf16.mxu0 0
    %169 = vmatpush1.bf16.msra.mxu0 0
    %170 = vmatprep.subr.bf16.mxu0 0
    %171 = vmatpush1.bf16.msra.mxu0 0
    %172 = vmatprep.mubr.bf16.mxu0 0
    %173 = vmatmul.mubr.bf16.gmra.mrb[0].mxu0 %v68
    %v174 = vpop.f32.mrb[0].mxu0
    %v175 = vadd.f32 %v90, %v174
    %v176 = vpop.f32.mrb[0].mxu0
    %v177 = vpop.f32.mrb[0].mxu0
    %v178 = vpop.f32.mrb[0].mxu0
    %179 = vdwg.mxu0
    %180 = vadd.xlane.f32.xlu0 %v175
    %v181 = vpop.xlane.xlu0 %180
    %v182 = vmul.f32 %v181, 0.03125
    %v183 = vmul.f32 %v175, %v175
    %184 = vadd.xlane.f32.xlu0 %v183
    %v185 = vpop.xlane.xlu0 %184
    %v186 = vmul.f32 %v185, 0.03125
    %v187 = vmul.f32 %v182, %v182
    %v188 = vsub.f32 %v186, %v187
    %v189 = vmax.f32 %v188, 0.0
    %v190 = vsub.f32 %v175, %v182
    %v191 = vadd.f32 %v189, 1e-05
    %v192 = vrsqrt.pop %v191
    %v193 = vmul.f32 %v190, %v192
    %v194 = vld [vmem:[%s3] sm:$0x1]
    %v196 = vlaneseq
    %v197 = vshrl.u32 %v196, 7
    %v198 = vsub.s32 0, %v197
    %v199 = vrot.slane %v194, %v198
    %v201 = vmul.f32 %v193, %v199
    %v202 = vld [vmem:[%s4] sm:$0x1]
    %v204 = vlaneseq
    %v205 = vshrl.u32 %v204, 7
    %v206 = vsub.s32 0, %v205
    %v207 = vrot.slane %v202, %v206
    %v209 = vadd.f32 %v201, %v207
    %v210 = vmul.f32 %v209, 0.5
    %v211 = vmul.f32 %v209, %v209
    %v212 = vmul.f32 %v211, %v209
    %v213 = vmul.f32 %v212, 0.044715
    %v214 = vadd.f32 %v209, %v213
    %v215 = vmul.f32 %v214, 0.7978846
    %v216 = vtanh.pop %v215
    %v217 = vadd.f32 %v216, 1.0
    %v218 = vmul.f32 %v210, %v217
    %v219 = vpack.c.bf16 %v218, %v218
    %v220 = vld [vmem:[#allocation7] sm:$0xf]
    %v221 = vld [vmem:[#allocation7 + $0x4] sm:$0xf]
    %v222 = vld [vmem:[#allocation7 + $0x8] sm:$0xf]
    %v223 = vld [vmem:[#allocation7 + $0xc] sm:$0xf]
    %v224 = vld [vmem:[#allocation7 + $0x10] sm:$0xf]
    %v225 = vld [vmem:[#allocation7 + $0x14] sm:$0xf]
    %v226 = vld [vmem:[#allocation7 + $0x18] sm:$0xf]
    %v227 = vld [vmem:[#allocation7 + $0x1c] sm:$0xf]
    %v228 = vld [vmem:[#allocation7 + $0x20] sm:$0xf]
    %v229 = vld [vmem:[#allocation7 + $0x24] sm:$0xf]
    %v230 = vld [vmem:[#allocation7 + $0x28] sm:$0xf]
    %v231 = vld [vmem:[#allocation7 + $0x2c] sm:$0xf]
    %v232 = vld [vmem:[#allocation7 + $0x30] sm:$0xf]
    %v233 = vld [vmem:[#allocation7 + $0x34] sm:$0xf]
    %v234 = vld [vmem:[#allocation7 + $0x38] sm:$0xf]
    %v235 = vld [vmem:[#allocation7 + $0x3c] sm:$0xf]
    %v236 = vld [vmem:[%s6] sm:$0x1]
    %v238 = vlaneseq
    %v239 = vshrl.u32 %v238, 7
    %v240 = vsub.s32 0, %v239
    %v241 = vrot.slane %v236, %v240
    %v259 = vunpack.c.l.b16 %v220
    %v260 = vunpack.c.l.b16 %v221
    %v261 = vunpack.c.l.b16 %v222
    %v262 = vunpack.c.l.b16 %v223
    %v263 = vunpack.c.l.b16 %v224
    %v264 = vunpack.c.l.b16 %v225
    %v265 = vunpack.c.l.b16 %v226
    %v266 = vunpack.c.l.b16 %v227
    %v267 = vunpack.c.l.b16 %v228
    %v268 = vunpack.c.l.b16 %v229
    %v269 = vunpack.c.l.b16 %v230
    %v270 = vunpack.c.l.b16 %v231
    %v271 = vunpack.c.l.b16 %v232
    %v272 = vunpack.c.l.b16 %v233
    %v273 = vunpack.c.l.b16 %v234
    %v274 = vunpack.c.l.b16 %v235
    %v275 = vpack.c.b16 %v260, %v259
    %v276 = vpack.c.b16 %v262, %v261
    %v277 = vpack.c.b16 %v264, %v263
    %v278 = vpack.c.b16 %v266, %v265
    %v279 = vpack.c.b16 %v268, %v267
    %v280 = vpack.c.b16 %v270, %v269
    %v281 = vpack.c.b16 %v272, %v271
    %v282 = vpack.c.b16 %v274, %v273
    %291 = vmatprep.subr.bf16.mxu0 0
    %292 = vmatpush1.bf16.msra.mxu0 %v275
    %293 = vmatprep.subr.bf16.mxu0 0
    %294 = vmatpush1.bf16.msra.mxu0 %v276
    %295 = vmatprep.subr.bf16.mxu0 0
    %296 = vmatpush1.bf16.msra.mxu0 %v277
    %297 = vmatprep.subr.bf16.mxu0 0
    %298 = vmatpush1.bf16.msra.mxu0 %v278
    %299 = vmatprep.subr.bf16.mxu0 0
    %300 = vmatpush1.bf16.msra.mxu0 %v279
    %301 = vmatprep.subr.bf16.mxu0 0
    %302 = vmatpush1.bf16.msra.mxu0 %v280
    %303 = vmatprep.subr.bf16.mxu0 0
    %304 = vmatpush1.bf16.msra.mxu0 %v281
    %305 = vmatprep.subr.bf16.mxu0 0
    %306 = vmatpush1.bf16.msra.mxu0 %v282
    %307 = vmatprep.subr.bf16.mxu0 0
    %308 = vmatpush1.bf16.msra.mxu0 0
    %309 = vmatprep.subr.bf16.mxu0 0
    %310 = vmatpush1.bf16.msra.mxu0 0
    %311 = vmatprep.subr.bf16.mxu0 0
    %312 = vmatpush1.bf16.msra.mxu0 0
    %313 = vmatprep.subr.bf16.mxu0 0
    %314 = vmatpush1.bf16.msra.mxu0 0
    %315 = vmatprep.subr.bf16.mxu0 0
    %316 = vmatpush1.bf16.msra.mxu0 0
    %317 = vmatprep.subr.bf16.mxu0 0
    %318 = vmatpush1.bf16.msra.mxu0 0
    %319 = vmatprep.subr.bf16.mxu0 0
    %320 = vmatpush1.bf16.msra.mxu0 0
    %321 = vmatprep.subr.bf16.mxu0 0
    %322 = vmatpush1.bf16.msra.mxu0 0
    %323 = vmatprep.mubr.bf16.mxu0 0
    %324 = vmatmul.mubr.bf16.gmra.mrb[0].mxu0 %v219
    %v325 = vpop.f32.mrb[0].mxu0
    %v326 = vadd.f32 %v241, %v325
    %v327 = vpop.f32.mrb[0].mxu0
    %v328 = vpop.f32.mrb[0].mxu0
    %v329 = vpop.f32.mrb[0].mxu0
    %330 = vdwg.mxu0
    %v331 = vxor.u32 %v326, 2147483648
    %v332 = vmul.f32 %v331, 1.442695
    %v333 = vpow.pop %v332
    %v334 = vadd.f32 %v333, 1.0
    %v335 = vrcp.pop %v334
    %v336 = vmul.f32 1.0, %v335
    %337 = vst [vmem:[#allocation8] sm:$0xff] %v336
    // Predicated region
    $region42: #{tpu_custom_call.1} parent=1 // pred_check
      _
    $region43: #{tpu_custom_call.1} parent=1 // pred_check_branch
      %339 = sbr.rel (0) target = $region45
    $region44: #{tpu_custom_call.1} parent=1 // pred_region
      %s341 = ssub.s32 128, 128
      %342 = vsyncadd [#allocation4], %s341
      %s344 = sshll.u32 [#allocation8], 4
      %s345 = int_to_ptr.vmem [resolvable:$true] %s344
      %347 = dma.vmem_to_hbm [thread:$0]  %s345, 128, %s7, [#allocation4]
    $region45: #{tpu_custom_call.1} parent=1 // pred_fallthru
      _
    // Predicated region
    $region46: #{tpu_custom_call.1} parent=1 // pred_check
      _
    $region47: #{tpu_custom_call.1} parent=1 // pred_check_branch
      %349 = sbr.rel (0) target = $region49
    $region48: #{tpu_custom_call.1} parent=1 // pred_region
      %350 = dma.done [#allocation4], 128
    $region49: #{tpu_custom_call.1} parent=1 // pred_fallthru
      _
    %351 = vsyncpa [#allocation3], 1
    %352 = vsyncpa [#allocation6], 1
    %353 = vsyncpa [#allocation4], 1

</llo_original>
